<compile_context>
chip_gen: v7x
topology: tpu7x:2x2x1
jax: 0.10.0
libtpu: 0.0.40
codegen_flags: <defaults>
</compile_context>

<pallas_src>
import jax
import jax.numpy as jnp
from jax.experimental import pallas as pl
from jax.experimental.pallas import tpu as pltpu

# Logical dims from the PyTorch module.
D_IN, H1, H2, D_OUT = 96, 200, 80, 1
# Lane-padded hidden dims (multiples of 128).
H1P, H2P = 256, 128


def q2net_kernel(x_ref, w1_ref, b1_ref, w2_ref, b2_ref, w3_ref, b3_ref, o_ref):
    # fc1 + ReLU (MXU, f32 accumulation)
    h1 = jnp.dot(x_ref[...], w1_ref[...], preferred_element_type=jnp.float32)
    h1 = jnp.maximum(h1 + b1_ref[...], 0.0)
    # fc2 + ReLU
    h2 = jnp.dot(h1, w2_ref[...], preferred_element_type=jnp.float32)
    h2 = jnp.maximum(h2 + b2_ref[...], 0.0)
    # fc3: single output column -> VPU mul + XLU cross-lane reduce.
    out = jnp.sum(h2 * w3_ref[...], axis=-1, keepdims=True) + b3_ref[...]
    o_ref[...] = out.astype(o_ref.dtype)


def _round_up(n, m):
    return ((n + m - 1) // m) * m


def _pad_params(params):
    """Zero-pad hidden dims to lane multiples; w3 becomes a (1, H2P) row."""
    w1, b1, w2, b2, w3, b3 = params
    w1p = jnp.zeros((D_IN, H1P), jnp.float32).at[:, :H1].set(w1)
    b1p = jnp.zeros((1, H1P), jnp.float32).at[:, :H1].set(b1)
    w2p = jnp.zeros((H1P, H2P), jnp.float32).at[:H1, :H2].set(w2)
    b2p = jnp.zeros((1, H2P), jnp.float32).at[:, :H2].set(b2)
    w3p = jnp.zeros((1, H2P), jnp.float32).at[:, :H2].set(w3.T)   # (80,1)->(1,80)
    b3p = b3.astype(jnp.float32)                                   # (1, 1)
    return w1p, b1p, w2p, b2p, w3p, b3p


def q2_net_forward(x, params, *, max_tile_rows=1024):
    """x: (B, 96) float32 -> (B, 1) float32."""
    B = x.shape[0]
    w1p, b1p, w2p, b2p, w3p, b3p = _pad_params(params)

    # Batch tile: big enough to amortize the ~0.35us/step overhead, small
    # enough that the double-buffered x tile stays in the low-MiB range.
    TB = min(max_tile_rows, _round_up(B, 8))
    Bp = _round_up(B, TB)
    if Bp != B:
        x = jnp.pad(x, ((0, Bp - B), (0, 0)))
    grid = (Bp // TB,)

    def const(shape):
        return pl.BlockSpec(shape, lambda i: (0,) * len(shape))

    param_bytes = 4 * (w1p.size + b1p.size + w2p.size + b2p.size
                       + w3p.size + b3p.size)
    cost = pl.CostEstimate(
        flops=2 * Bp * (D_IN * H1 + H1 * H2 + H2 * D_OUT),
        transcendentals=0,
        bytes_accessed=4 * Bp * (D_IN + D_OUT) + param_bytes,
    )

    out = pl.pallas_call(
        q2net_kernel,
        out_shape=jax.ShapeDtypeStruct((Bp, D_OUT), jnp.float32),
        grid_spec=pltpu.PrefetchScalarGridSpec(
            num_scalar_prefetch=0,
            grid=grid,
            in_specs=[
                pl.BlockSpec((TB, D_IN), lambda i: (i, 0)),   # streamed x tiles
                const((D_IN, H1P)), const((1, H1P)),          # resident params
                const((H1P, H2P)), const((1, H2P)),
                const((1, H2P)), const((1, D_OUT)),
            ],
            out_specs=pl.BlockSpec((TB, D_OUT), lambda i: (i, 0)),
        ),
        compiler_params=pltpu.CompilerParams(
            dimension_semantics=("parallel",),
        ),
        cost_estimate=cost,
    )(x, w1p, b1p, w2p, b2p, w3p, b3p)
    return out[:B]


def init_params(key):
    """Deterministic init mimicking nn.Linear's U(-1/sqrt(fan_in), +1/sqrt(fan_in))."""
    dims = [(D_IN, H1), (H1, H2), (H2, D_OUT)]
    params = []
    for fan_in, fan_out in dims:
        kw, kb, key = jax.random.split(key, 3)
        bound = 1.0 / jnp.sqrt(fan_in)
        w = jax.random.uniform(kw, (fan_in, fan_out), jnp.float32, -bound, bound)
        b = jax.random.uniform(kb, (1, fan_out), jnp.float32, -bound, bound)
        params += [w, b]
    return tuple(params)


def reference_forward(x, params):
    w1, b1, w2, b2, w3, b3 = params
    h1 = jax.nn.relu(x @ w1 + b1)
    h2 = jax.nn.relu(h1 @ w2 + b2)
    return h2 @ w3 + b3


if __name__ == "__main__":
    key = jax.random.PRNGKey(0)
    kx, kx2, kp = jax.random.split(key, 3)
    params = init_params(kp)

    # Small check (single tile).
    B = 8
    x = jax.random.normal(kx, (B, D_IN), jnp.float32)
    out = jax.block_until_ready(q2_net_forward(x, params))
    ref = reference_forward(x, params)
    assert out.shape == (B, 1), out.shape
    assert jnp.allclose(out, ref, atol=1e-4, rtol=1e-4), \
        f"max abs err {jnp.max(jnp.abs(out - ref))}"

    # Multi-tile check (exercises the batch grid + padding path).
    B2 = 300
    x2 = jax.random.normal(kx2, (B2, D_IN), jnp.float32)
    out2 = jax.block_until_ready(q2_net_forward(x2, params, max_tile_rows=128))
    ref2 = reference_forward(x2, params)
    assert out2.shape == (B2, 1), out2.shape
    assert jnp.allclose(out2, ref2, atol=1e-4, rtol=1e-4), \
        f"max abs err {jnp.max(jnp.abs(out2 - ref2))}"

    print("KERNEL_OK")
</pallas_src>

<mosaic_0001>
module attributes {stable_mosaic.version = 11 : i64} {
  func.func @q2net_kernel(%arg0: i32, %arg1: memref<8x96xf32, #tpu.memory_space<vmem>>, %arg2: memref<96x256xf32, #tpu.memory_space<vmem>>, %arg3: memref<1x256xf32, #tpu.memory_space<vmem>>, %arg4: memref<256x128xf32, #tpu.memory_space<vmem>>, %arg5: memref<1x128xf32, #tpu.memory_space<vmem>>, %arg6: memref<1x128xf32, #tpu.memory_space<vmem>>, %arg7: memref<1x1xf32, #tpu.memory_space<vmem>>, %arg8: memref<8x1xf32, #tpu.memory_space<vmem>>) attributes {dimension_semantics = [#tpu.dimension_semantics<parallel>], iteration_bounds = array<i64: 1>, scalar_prefetch = 0 : i64, scratch_operands = 0 : i64, tpu.core_type = #tpu.core_type<tc>, window_params = [{transform_indices = @transform_0, window_bounds = array<i64: 8, 96>}, {pipeline_mode = #tpu.pipeline_mode<synchronous>, transform_indices = @transform_1, window_bounds = array<i64: 96, 256>}, {pipeline_mode = #tpu.pipeline_mode<synchronous>, transform_indices = @transform_2, window_bounds = array<i64: 1, 256>}, {pipeline_mode = #tpu.pipeline_mode<synchronous>, transform_indices = @transform_3, window_bounds = array<i64: 256, 128>}, {pipeline_mode = #tpu.pipeline_mode<synchronous>, transform_indices = @transform_4, window_bounds = array<i64: 1, 128>}, {pipeline_mode = #tpu.pipeline_mode<synchronous>, transform_indices = @transform_5, window_bounds = array<i64: 1, 128>}, {pipeline_mode = #tpu.pipeline_mode<synchronous>, transform_indices = @transform_6, window_bounds = array<i64: 1, 1>}, {transform_indices = @transform_7, window_bounds = array<i64: 8, 1>}]} {
    %c0 = arith.constant 0 : index
    %c0_0 = arith.constant 0 : index
    %0 = vector.load %arg1[%c0, %c0_0] : memref<8x96xf32, #tpu.memory_space<vmem>>, vector<8x96xf32>
    %c0_1 = arith.constant 0 : index
    %c0_2 = arith.constant 0 : index
    %1 = vector.load %arg2[%c0_1, %c0_2] : memref<96x256xf32, #tpu.memory_space<vmem>>, vector<96x256xf32>
    %cst = arith.constant dense<0.000000e+00> : vector<8x256xf32>
    %2 = tpu.matmul %0, %1, %cst {dimension_numbers = #tpu.dot_dimension_numbers<[1], [0], [0], [1], [0, 0, 1, 1], [], []>} : vector<8x96xf32>, vector<96x256xf32>, vector<8x256xf32> -> vector<8x256xf32>
    %c0_3 = arith.constant 0 : index
    %c0_4 = arith.constant 0 : index
    %3 = vector.load %arg3[%c0_3, %c0_4] : memref<1x256xf32, #tpu.memory_space<vmem>>, vector<1x256xf32>
    %4 = vector.broadcast %3 : vector<1x256xf32> to vector<8x256xf32>
    %5 = arith.addf %2, %4 : vector<8x256xf32>
    %cst_5 = arith.constant 0.000000e+00 : f32
    %6 = vector.broadcast %cst_5 : f32 to vector<8x256xf32>
    %7 = arith.maximumf %5, %6 : vector<8x256xf32>
    %c0_6 = arith.constant 0 : index
    %c0_7 = arith.constant 0 : index
    %8 = vector.load %arg4[%c0_6, %c0_7] : memref<256x128xf32, #tpu.memory_space<vmem>>, vector<256x128xf32>
    %cst_8 = arith.constant dense<0.000000e+00> : vector<8x128xf32>
    %9 = tpu.matmul %7, %8, %cst_8 {dimension_numbers = #tpu.dot_dimension_numbers<[1], [0], [0], [1], [0, 0, 1, 1], [], []>} : vector<8x256xf32>, vector<256x128xf32>, vector<8x128xf32> -> vector<8x128xf32>
    %c0_9 = arith.constant 0 : index
    %c0_10 = arith.constant 0 : index
    %10 = vector.load %arg5[%c0_9, %c0_10] : memref<1x128xf32, #tpu.memory_space<vmem>>, vector<1x128xf32>
    %11 = vector.broadcast %10 : vector<1x128xf32> to vector<8x128xf32>
    %12 = arith.addf %9, %11 : vector<8x128xf32>
    %cst_11 = arith.constant 0.000000e+00 : f32
    %13 = vector.broadcast %cst_11 : f32 to vector<8x128xf32>
    %14 = arith.maximumf %12, %13 : vector<8x128xf32>
    %c0_12 = arith.constant 0 : index
    %c0_13 = arith.constant 0 : index
    %15 = vector.load %arg6[%c0_12, %c0_13] : memref<1x128xf32, #tpu.memory_space<vmem>>, vector<1x128xf32>
    %16 = vector.broadcast %15 : vector<1x128xf32> to vector<8x128xf32>
    %17 = arith.mulf %14, %16 : vector<8x128xf32>
    %cst_14 = arith.constant dense<0.000000e+00> : vector<8xf32>
    %18 = vector.multi_reduction <add>, %17, %cst_14 [1] : vector<8x128xf32> to vector<8xf32>
    %19 = vector.shape_cast %18 : vector<8xf32> to vector<8x1xf32>
    %c0_15 = arith.constant 0 : index
    %c0_16 = arith.constant 0 : index
    %20 = vector.load %arg7[%c0_15, %c0_16] : memref<1x1xf32, #tpu.memory_space<vmem>>, vector<1x1xf32>
    %21 = vector.broadcast %20 : vector<1x1xf32> to vector<8x1xf32>
    %22 = arith.addf %19, %21 : vector<8x1xf32>
    %c0_17 = arith.constant 0 : index
    %c0_18 = arith.constant 0 : index
    %23 = vector.load %arg8[%c0_17, %c0_18] : memref<8x1xf32, #tpu.memory_space<vmem>>, vector<8x1xf32>
    tpu.vector_store %arg8[%c0_17, %c0_18], %22 {strides = array<i32>} : memref<8x1xf32, #tpu.memory_space<vmem>>, vector<8x1xf32>,
    return
  }
  func.func @transform_0(%arg0: i32) -> (i32, i32) {
    %c0_i32 = arith.constant 0 : i32
    %c0_i32_0 = arith.constant 0 : i32
    return %arg0, %c0_i32 : i32, i32
  }
  func.func @transform_1(%arg0: i32) -> (i32, i32) {
    %c0_i32 = arith.constant 0 : i32
    %c0_i32_0 = arith.constant 0 : i32
    %c0_i32_1 = arith.constant 0 : i32
    return %c0_i32, %c0_i32_0 : i32, i32
  }
  func.func @transform_2(%arg0: i32) -> (i32, i32) {
    %c0_i32 = arith.constant 0 : i32
    %c0_i32_0 = arith.constant 0 : i32
    %c0_i32_1 = arith.constant 0 : i32
    return %c0_i32, %c0_i32_0 : i32, i32
  }
  func.func @transform_3(%arg0: i32) -> (i32, i32) {
    %c0_i32 = arith.constant 0 : i32
    %c0_i32_0 = arith.constant 0 : i32
    %c0_i32_1 = arith.constant 0 : i32
    return %c0_i32, %c0_i32_0 : i32, i32
  }
  func.func @transform_4(%arg0: i32) -> (i32, i32) {
    %c0_i32 = arith.constant 0 : i32
    %c0_i32_0 = arith.constant 0 : i32
    %c0_i32_1 = arith.constant 0 : i32
    return %c0_i32, %c0_i32_0 : i32, i32
  }
  func.func @transform_5(%arg0: i32) -> (i32, i32) {
    %c0_i32 = arith.constant 0 : i32
    %c0_i32_0 = arith.constant 0 : i32
    %c0_i32_1 = arith.constant 0 : i32
    return %c0_i32, %c0_i32_0 : i32, i32
  }
  func.func @transform_6(%arg0: i32) -> (i32, i32) {
    %c0_i32 = arith.constant 0 : i32
    %c0_i32_0 = arith.constant 0 : i32
    %c0_i32_1 = arith.constant 0 : i32
    return %c0_i32, %c0_i32_0 : i32, i32
  }
  func.func @transform_7(%arg0: i32) -> (i32, i32) {
    %c0_i32 = arith.constant 0 : i32
    %c0_i32_0 = arith.constant 0 : i32
    return %arg0, %c0_i32 : i32, i32
  }
}

</mosaic_0001>

<llo_original>
// kernel: tpu_custom_call.1
$region0: #{tpu_custom_call.1}
  #allocation0 [shape = 'u32[]', space=smem, size = 0x4, offset = 0x4, fixed_abs, tag = 'smem constant byte address 0x4 - core index']
  #allocation1 [shape = 'u32[144,128]{1,0:T(1,128)}', space=vmem, size = 0x12000, scoped, tag = 'internal scratch']
  #allocation2 [shape = 'f32[1,1]{1,0:T(1,128)S(1)}', space=vmem, size = 0x200, scoped, tag = 'scoped memory for tpu_custom_call.1']
  %s0 = inlined_call_operand.hbm [shape: f32[8,96], index: 0, kind: input, shape index: {}]
  %s1 = inlined_call_operand.hbm [shape: f32[96,256], index: 1, kind: input, shape index: {}]
  %s2 = inlined_call_operand.vmem [shape: f32[1,256], index: 2, kind: input, shape index: {}]
  %s3 = inlined_call_operand.hbm [shape: f32[256,128], index: 3, kind: input, shape index: {}]
  %s4 = inlined_call_operand.vmem [shape: f32[1,128], index: 4, kind: input, shape index: {}]
  %s5 = inlined_call_operand.vmem [shape: f32[1,128], index: 5, kind: input, shape index: {}]
  %s6 = inlined_call_operand.<no memory space> [shape: f32[1,1], index: 6, kind: input, shape index: {}]
  %s7 = inlined_call_operand.vmem [shape: f32[8,1], index: 7, kind: output, shape index: {}]
  %s8 = sld [smem:[#allocation0]]
  $region50: #{tpu_custom_call.1} parent=0
    _
  %s10 = ssub.s32 1, %s8
  %s11 = scalar_select 0, %s10, %s8
  %v12 = vstv %s6
  %13 = vst [vmem:[#allocation2] sm:$0x1] %v12
  $region1: #{tpu_custom_call.1} parent=0
    #allocation3 [shape = 'u8[4096]{0}', space=vmem, size = 0x1000, scoped, tag = 'input window, operand 0, single buffered']
    #allocation4 [shape = 's32[1]{0}', space=sflag, size = 0x4, scoped, tag = 'scoped memory for tpu_custom_call.1']
    #allocation5 [shape = 'u8[98304]{0}', space=vmem, size = 0x18000, scoped, tag = 'input window, operand 1, single buffered']
    #allocation6 [shape = 's32[1]{0}', space=sflag, size = 0x4, scoped, tag = 'scoped memory for tpu_custom_call.1']
    #allocation7 [shape = 'u8[131072]{0}', space=vmem, size = 0x20000, scoped, tag = 'input window, operand 3, single buffered']
    %14 = vsyncpa [#allocation4], 0
    %15 = vsyncpa [#allocation6], 0
    // Predicated region
    $region2: #{tpu_custom_call.1} parent=1 // pred_check
      _
    $region3: #{tpu_custom_call.1} parent=1 // pred_check_branch
      %17 = sbr.rel (0) target = $region5
    $region4: #{tpu_custom_call.1} parent=1 // pred_region
      %s19 = ssub.s32 128, 128
      %20 = vsyncadd [#allocation4], %s19
      %s22 = sshll.u32 [#allocation3], 4
      %s23 = int_to_ptr.vmem [resolvable:$true] %s22
      %25 = dma.hbm_to_vmem [thread:$0]  %s0, 128, %s23, [#allocation4]
    $region5: #{tpu_custom_call.1} parent=1 // pred_fallthru
      _
    // Predicated region
    $region6: #{tpu_custom_call.1} parent=1 // pred_check
      _
    $region7: #{tpu_custom_call.1} parent=1 // pred_check_branch
      %27 = sbr.rel (0) target = $region9
    $region8: #{tpu_custom_call.1} parent=1 // pred_region
      %s29 = ssub.s32 3072, 3072
      %30 = vsyncadd [#allocation6], %s29
      %s31 = sshll.u32 [#allocation5], 4
      %s32 = int_to_ptr.vmem [resolvable:$true] %s31
      %37 = dma.hbm_to_vmem [thread:$0]  %s1, 3072, %s32, [#allocation6], 256, 256, 16
    $region9: #{tpu_custom_call.1} parent=1 // pred_fallthru
      _
    // Predicated region
    $region10: #{tpu_custom_call.1} parent=1 // pred_check
      _
    $region11: #{tpu_custom_call.1} parent=1 // pred_check_branch
      %39 = sbr.rel (0) target = $region13
    $region12: #{tpu_custom_call.1} parent=1 // pred_region
      _
    $region13: #{tpu_custom_call.1} parent=1 // pred_fallthru
      _
    // Predicated region
    $region14: #{tpu_custom_call.1} parent=1 // pred_check
      _
    $region15: #{tpu_custom_call.1} parent=1 // pred_check_branch
      %41 = sbr.rel (0) target = $region17
    $region16: #{tpu_custom_call.1} parent=1 // pred_region
      %s43 = ssub.s32 4096, 4096
      %44 = vsyncadd [#allocation6], %s43
      %s45 = sshll.u32 [#allocation7], 4
      %s46 = int_to_ptr.vmem [resolvable:$true] %s45
      %51 = dma.hbm_to_vmem [thread:$0]  %s3, 4096, %s46, [#allocation6], 128, 128, 8
    $region17: #{tpu_custom_call.1} parent=1 // pred_fallthru
      _
    // Predicated region
    $region18: #{tpu_custom_call.1} parent=1 // pred_check
      _
    $region19: #{tpu_custom_call.1} parent=1 // pred_check_branch
      %53 = sbr.rel (0) target = $region21
    $region20: #{tpu_custom_call.1} parent=1 // pred_region
      _
    $region21: #{tpu_custom_call.1} parent=1 // pred_fallthru
      _
    // Predicated region
    $region22: #{tpu_custom_call.1} parent=1 // pred_check
      _
    $region23: #{tpu_custom_call.1} parent=1 // pred_check_branch
      %55 = sbr.rel (0) target = $region25
    $region24: #{tpu_custom_call.1} parent=1 // pred_region
      _
    $region25: #{tpu_custom_call.1} parent=1 // pred_fallthru
      _
    // Predicated region
    $region26: #{tpu_custom_call.1} parent=1 // pred_check
      _
    $region27: #{tpu_custom_call.1} parent=1 // pred_check_branch
      %57 = sbr.rel (0) target = $region29
    $region28: #{tpu_custom_call.1} parent=1 // pred_region
      _
    $region29: #{tpu_custom_call.1} parent=1 // pred_fallthru
      _
    // Predicated region
    $region30: #{tpu_custom_call.1} parent=1 // pred_check
      _
    $region31: #{tpu_custom_call.1} parent=1 // pred_check_branch
      %59 = sbr.rel (0) target = $region33
    $region32: #{tpu_custom_call.1} parent=1 // pred_region
      %60 = dma.done [#allocation4], 128
    $region33: #{tpu_custom_call.1} parent=1 // pred_fallthru
      _
    // Predicated region
    $region34: #{tpu_custom_call.1} parent=1 // pred_check
      _
    $region35: #{tpu_custom_call.1} parent=1 // pred_check_branch
      %62 = sbr.rel (0) target = $region37
    $region36: #{tpu_custom_call.1} parent=1 // pred_region
      %63 = dma.done [#allocation6], 3072
    $region37: #{tpu_custom_call.1} parent=1 // pred_fallthru
      _
    // Predicated region
    $region38: #{tpu_custom_call.1} parent=1 // pred_check
      _
    $region39: #{tpu_custom_call.1} parent=1 // pred_check_branch
      %65 = sbr.rel (0) target = $region41
    $region40: #{tpu_custom_call.1} parent=1 // pred_region
      %66 = dma.done [#allocation6], 4096
    $region41: #{tpu_custom_call.1} parent=1 // pred_fallthru
      _
    %v67 = vld [vmem:[#allocation3] sm:$0xff]
    %v68 = vld [vmem:[#allocation5] sm:$0xff]
    %v69 = vld [vmem:[#allocation5 + $0x8] sm:$0xff]
    %v70 = vld [vmem:[#allocation5 + $0x10] sm:$0xff]
    %v71 = vld [vmem:[#allocation5 + $0x18] sm:$0xff]
    %v72 = vld [vmem:[#allocation5 + $0x20] sm:$0xff]
    %v73 = vld [vmem:[#allocation5 + $0x28] sm:$0xff]
    %v74 = vld [vmem:[#allocation5 + $0x30] sm:$0xff]
    %v75 = vld [vmem:[#allocation5 + $0x38] sm:$0xff]
    %v76 = vld [vmem:[#allocation5 + $0x40] sm:$0xff]
    %v77 = vld [vmem:[#allocation5 + $0x48] sm:$0xff]
    %v78 = vld [vmem:[#allocation5 + $0x50] sm:$0xff]
    %v79 = vld [vmem:[#allocation5 + $0x58] sm:$0xff]
    %v80 = vld [vmem:[#allocation5 + $0x60] sm:$0xff]
    %v81 = vld [vmem:[#allocation5 + $0x68] sm:$0xff]
    %v82 = vld [vmem:[#allocation5 + $0x70] sm:$0xff]
    %v83 = vld [vmem:[#allocation5 + $0x78] sm:$0xff]
    %v84 = vld [vmem:[#allocation5 + $0x80] sm:$0xff]
    %v85 = vld [vmem:[#allocation5 + $0x88] sm:$0xff]
    %v86 = vld [vmem:[#allocation5 + $0x90] sm:$0xff]
    %v87 = vld [vmem:[#allocation5 + $0x98] sm:$0xff]
    %v88 = vld [vmem:[#allocation5 + $0xa0] sm:$0xff]
    %v89 = vld [vmem:[#allocation5 + $0xa8] sm:$0xff]
    %v90 = vld [vmem:[#allocation5 + $0xb0] sm:$0xff]
    %v91 = vld [vmem:[#allocation5 + $0xb8] sm:$0xff]
    %v92 = vld [vmem:[%s2] sm:$0x3]
    %v94 = vlaneseq
    %v95 = vshrl.u32 %v94, 7
    %v96 = vsub.s32 0, %v95
    %v97 = vrot.slane %v92, %v96
    %v98 = vlaneseq
    %v99 = vshrl.u32 %v98, 7
    %v100 = vsub.s32 1, %v99
    %v101 = vrot.slane %v92, %v100
    %vm104 = vcmask 785408
    %v106 = vsel %vm104, %v67, 0
    %108 = vmatprep.subr.mxu0 %v69
    %109 = vmatpush1.msra.mxu0 %v68
    %110 = vmatprep.subr.mxu0 %v71
    %111 = vmatpush1.msra.mxu0 %v70
    %112 = vmatprep.subr.mxu0 %v73
    %113 = vmatpush1.msra.mxu0 %v72
    %114 = vmatprep.subr.mxu0 %v75
    %115 = vmatpush1.msra.mxu0 %v74
    %116 = vmatprep.subr.mxu0 %v77
    %117 = vmatpush1.msra.mxu0 %v76
    %118 = vmatprep.subr.mxu0 %v79
    %119 = vmatpush1.msra.mxu0 %v78
    %120 = vmatprep.subr.mxu0 %v81
    %121 = vmatpush1.msra.mxu0 %v80
    %122 = vmatprep.subr.mxu0 %v83
    %123 = vmatpush1.msra.mxu0 %v82
    %124 = vmatprep.subr.mxu0 %v85
    %125 = vmatpush1.msra.mxu0 %v84
    %126 = vmatprep.subr.mxu0 %v87
    %127 = vmatpush1.msra.mxu0 %v86
    %128 = vmatprep.subr.mxu0 %v89
    %129 = vmatpush1.msra.mxu0 %v88
    %130 = vmatprep.subr.mxu0 %v91
    %131 = vmatpush1.msra.mxu0 %v90
    %132 = vmatprep.subr.mxu0 0.0
    %133 = vmatpush1.msra.mxu0 0.0
    %134 = vmatprep.subr.mxu0 0.0
    %135 = vmatpush1.msra.mxu0 0.0
    %136 = vmatprep.subr.mxu0 0.0
    %137 = vmatpush1.msra.mxu0 0.0
    %138 = vmatprep.subr.mxu0 0.0
    %139 = vmatpush1.msra.mxu0 0.0
    %140 = vmatprep.subr.mxu0 0.0
    %141 = vmatpush1.msra.mxu0 0.0
    %142 = vmatprep.subr.mxu0 0.0
    %143 = vmatpush1.msra.mxu0 0.0
    %144 = vmatprep.subr.mxu0 0.0
    %145 = vmatpush1.msra.mxu0 0.0
    %146 = vmatprep.subr.mxu0 0.0
    %147 = vmatpush1.msra.mxu0 0.0
    %148 = vmatprep.subr.mxu0 0.0
    %149 = vmatpush1.msra.mxu0 0.0
    %150 = vmatprep.subr.mxu0 0.0
    %151 = vmatpush1.msra.mxu0 0.0
    %152 = vmatprep.subr.mxu0 0.0
    %153 = vmatpush1.msra.mxu0 0.0
    %154 = vmatprep.subr.mxu0 0.0
    %155 = vmatpush1.msra.mxu0 0.0
    %156 = vmatprep.subr.mxu0 0.0
    %157 = vmatpush1.msra.mxu0 0.0
    %158 = vmatprep.subr.mxu0 0.0
    %159 = vmatpush1.msra.mxu0 0.0
    %160 = vmatprep.subr.mxu0 0.0
    %161 = vmatpush1.msra.mxu0 0.0
    %162 = vmatprep.subr.mxu0 0.0
    %163 = vmatpush1.msra.mxu0 0.0
    %164 = vmatprep.subr.mxu0 0.0
    %165 = vmatpush1.msra.mxu0 0.0
    %166 = vmatprep.subr.mxu0 0.0
    %167 = vmatpush1.msra.mxu0 0.0
    %168 = vmatprep.subr.mxu0 0.0
    %169 = vmatpush1.msra.mxu0 0.0
    %170 = vmatprep.subr.mxu0 0.0
    %171 = vmatpush1.msra.mxu0 0.0
    %172 = vmatprep.mubr.f32.mxu0 0.0
    %173 = vmatmul.mubr.f32.gmra.mrb[0].mxu0 %v106
    %v174 = vpop.f32.mrb[0].mxu0
    %v175 = vadd.f32 %v97, %v174
    %v176 = vpop.f32.mrb[0].mxu0
    %v177 = vadd.f32 %v101, %v176
    %178 = vdwg.mxu0
    %v179 = vmax.f32 %v175, 0.0
    %v180 = vmax.f32 %v177, 0.0
    %v181 = vld [vmem:[#allocation7] sm:$0xff]
    %v182 = vld [vmem:[#allocation7 + $0x8] sm:$0xff]
    %v183 = vld [vmem:[#allocation7 + $0x10] sm:$0xff]
    %v184 = vld [vmem:[#allocation7 + $0x18] sm:$0xff]
    %v185 = vld [vmem:[#allocation7 + $0x20] sm:$0xff]
    %v186 = vld [vmem:[#allocation7 + $0x28] sm:$0xff]
    %v187 = vld [vmem:[#allocation7 + $0x30] sm:$0xff]
    %v188 = vld [vmem:[#allocation7 + $0x38] sm:$0xff]
    %v189 = vld [vmem:[#allocation7 + $0x40] sm:$0xff]
    %v190 = vld [vmem:[#allocation7 + $0x48] sm:$0xff]
    %v191 = vld [vmem:[#allocation7 + $0x50] sm:$0xff]
    %v192 = vld [vmem:[#allocation7 + $0x58] sm:$0xff]
    %v193 = vld [vmem:[#allocation7 + $0x60] sm:$0xff]
    %v194 = vld [vmem:[#allocation7 + $0x68] sm:$0xff]
    %v195 = vld [vmem:[#allocation7 + $0x70] sm:$0xff]
    %v196 = vld [vmem:[#allocation7 + $0x78] sm:$0xff]
    %v197 = vld [vmem:[#allocation7 + $0x80] sm:$0xff]
    %v198 = vld [vmem:[#allocation7 + $0x88] sm:$0xff]
    %v199 = vld [vmem:[#allocation7 + $0x90] sm:$0xff]
    %v200 = vld [vmem:[#allocation7 + $0x98] sm:$0xff]
    %v201 = vld [vmem:[#allocation7 + $0xa0] sm:$0xff]
    %v202 = vld [vmem:[#allocation7 + $0xa8] sm:$0xff]
    %v203 = vld [vmem:[#allocation7 + $0xb0] sm:$0xff]
    %v204 = vld [vmem:[#allocation7 + $0xb8] sm:$0xff]
    %v205 = vld [vmem:[#allocation7 + $0xc0] sm:$0xff]
    %v206 = vld [vmem:[#allocation7 + $0xc8] sm:$0xff]
    %v207 = vld [vmem:[#allocation7 + $0xd0] sm:$0xff]
    %v208 = vld [vmem:[#allocation7 + $0xd8] sm:$0xff]
    %v209 = vld [vmem:[#allocation7 + $0xe0] sm:$0xff]
    %v210 = vld [vmem:[#allocation7 + $0xe8] sm:$0xff]
    %v211 = vld [vmem:[#allocation7 + $0xf0] sm:$0xff]
    %v212 = vld [vmem:[#allocation7 + $0xf8] sm:$0xff]
    %v213 = vld [vmem:[%s4] sm:$0x1]
    %v215 = vlaneseq
    %v216 = vshrl.u32 %v215, 7
    %v217 = vsub.s32 0, %v216
    %v218 = vrot.slane %v213, %v217
    %220 = vmatprep.subr.mxu0 0.0
    %221 = vmatpush1.msra.mxu0 %v181
    %222 = vmatprep.subr.mxu0 0.0
    %223 = vmatpush1.msra.mxu0 %v182
    %224 = vmatprep.subr.mxu0 0.0
    %225 = vmatpush1.msra.mxu0 %v183
    %226 = vmatprep.subr.mxu0 0.0
    %227 = vmatpush1.msra.mxu0 %v184
    %228 = vmatprep.subr.mxu0 0.0
    %229 = vmatpush1.msra.mxu0 %v185
    %230 = vmatprep.subr.mxu0 0.0
    %231 = vmatpush1.msra.mxu0 %v186
    %232 = vmatprep.subr.mxu0 0.0
    %233 = vmatpush1.msra.mxu0 %v187
    %234 = vmatprep.subr.mxu0 0.0
    %235 = vmatpush1.msra.mxu0 %v188
    %236 = vmatprep.subr.mxu0 0.0
    %237 = vmatpush1.msra.mxu0 %v189
    %238 = vmatprep.subr.mxu0 0.0
    %239 = vmatpush1.msra.mxu0 %v190
    %240 = vmatprep.subr.mxu0 0.0
    %241 = vmatpush1.msra.mxu0 %v191
    %242 = vmatprep.subr.mxu0 0.0
    %243 = vmatpush1.msra.mxu0 %v192
    %244 = vmatprep.subr.mxu0 0.0
    %245 = vmatpush1.msra.mxu0 %v193
    %246 = vmatprep.subr.mxu0 0.0
    %247 = vmatpush1.msra.mxu0 %v194
    %248 = vmatprep.subr.mxu0 0.0
    %249 = vmatpush1.msra.mxu0 %v195
    %250 = vmatprep.subr.mxu0 0.0
    %251 = vmatpush1.msra.mxu0 %v196
    %252 = vmatprep.subr.mxu0 0.0
    %253 = vmatpush1.msra.mxu0 %v197
    %254 = vmatprep.subr.mxu0 0.0
    %255 = vmatpush1.msra.mxu0 %v198
    %256 = vmatprep.subr.mxu0 0.0
    %257 = vmatpush1.msra.mxu0 %v199
    %258 = vmatprep.subr.mxu0 0.0
    %259 = vmatpush1.msra.mxu0 %v200
    %260 = vmatprep.subr.mxu0 0.0
    %261 = vmatpush1.msra.mxu0 %v201
    %262 = vmatprep.subr.mxu0 0.0
    %263 = vmatpush1.msra.mxu0 %v202
    %264 = vmatprep.subr.mxu0 0.0
    %265 = vmatpush1.msra.mxu0 %v203
    %266 = vmatprep.subr.mxu0 0.0
    %267 = vmatpush1.msra.mxu0 %v204
    %268 = vmatprep.subr.mxu0 0.0
    %269 = vmatpush1.msra.mxu0 %v205
    %270 = vmatprep.subr.mxu0 0.0
    %271 = vmatpush1.msra.mxu0 %v206
    %272 = vmatprep.subr.mxu0 0.0
    %273 = vmatpush1.msra.mxu0 %v207
    %274 = vmatprep.subr.mxu0 0.0
    %275 = vmatpush1.msra.mxu0 %v208
    %276 = vmatprep.subr.mxu0 0.0
    %277 = vmatpush1.msra.mxu0 %v209
    %278 = vmatprep.subr.mxu0 0.0
    %279 = vmatpush1.msra.mxu0 %v210
    %280 = vmatprep.subr.mxu0 0.0
    %281 = vmatpush1.msra.mxu0 %v211
    %282 = vmatprep.subr.mxu0 0.0
    %283 = vmatpush1.msra.mxu0 %v212
    %284 = vmatprep.mubr.f32.mxu0 %v180
    %285 = vmatmul.mubr.f32.gmra.mrb[0].mxu0 %v179
    %v286 = vpop.f32.mrb[0].mxu0
    %v287 = vadd.f32 %v218, %v286
    %v288 = vpop.f32.mrb[0].mxu0
    %289 = vdwg.mxu0
    %v290 = vmax.f32 %v287, 0.0
    %v291 = vld [vmem:[%s5] sm:$0x1]
    %v293 = vlaneseq
    %v294 = vshrl.u32 %v293, 7
    %v295 = vsub.s32 0, %v294
    %v296 = vrot.slane %v291, %v295
    %v298 = vmul.f32 %v290, %v296
    %299 = vadd.xlane.f32.xlu0 %v298
    %v300 = vpop.xlane.xlu0 %299
    %v301 = vld [vmem:[#allocation2] sm:$0x1]
    %v303 = vlaneseq
    %v304 = vshrl.u32 %v303, 7
    %v305 = vsub.s32 0, %v304
    %v306 = vrot.slane %v301, %v305
    %v308 = vadd.f32 %v300, %v306
    %vm309 = vcmask 7168
    %310 = vst.msk [vmem:[%s7] sm:$0xff] %vm309, %v308
    // Predicated region
    $region42: #{tpu_custom_call.1} parent=1 // pred_check
      _
    $region43: #{tpu_custom_call.1} parent=1 // pred_check_branch
      %312 = sbr.rel (0) target = $region45
    $region44: #{tpu_custom_call.1} parent=1 // pred_region
      _
    $region45: #{tpu_custom_call.1} parent=1 // pred_fallthru
      _
    // Predicated region
    $region46: #{tpu_custom_call.1} parent=1 // pred_check
      _
    $region47: #{tpu_custom_call.1} parent=1 // pred_check_branch
      %314 = sbr.rel (0) target = $region49
    $region48: #{tpu_custom_call.1} parent=1 // pred_region
      _
    $region49: #{tpu_custom_call.1} parent=1 // pred_fallthru
      _
    %315 = vsyncpa [#allocation4], 1
    %316 = vsyncpa [#allocation6], 1

</llo_original>
